<compile_context>
chip_gen: v7x
topology: tpu7x:2x2x1
jax: 0.10.0
libtpu: 0.0.40
codegen_flags: <defaults>
</compile_context>

<pallas_src>
import functools
import math

import jax
import jax.numpy as jnp
from jax.experimental import pallas as pl
from jax.experimental.pallas import tpu as pltpu

SELU_ALPHA = 1.6732632423543772848170429916717
SELU_SCALE = 1.0507009873554804934193349852946

_LANE = 128
_SUBLANE = 8


def _round_up(n, m):
    return ((n + m - 1) // m) * m


def _selu_core(x):
    """SELU *without* the outer scale (the scale is folded into the next layer's W).
    NOTE: jnp.where evaluates both branches; fine for forward (inf on the discarded
    positive-exp branch is dropped) -- use a safe-where if this is ever differentiated."""
    alpha = jnp.asarray(SELU_ALPHA, x.dtype)
    one = jnp.asarray(1.0, x.dtype)
    return jnp.where(x > 0, x, alpha * (jnp.exp(x) - one))


def _default_act_dtype():
    """bf16 activation on chips with a bf16 VPU/EUP (v6e / v7x); f32 elsewhere (v5e-)."""
    try:
        kind = jax.devices()[0].device_kind.lower()
    except Exception:
        return jnp.float32
    if any(v in kind for v in ("v2", "v3", "v4", "v5")):
        return jnp.float32
    return jnp.bfloat16


def _fused_mlp_kernel(*refs, num_layers, act_dtype):
    """refs = (x_ref, w_0..w_{L-1}, b_0..b_{L-1}, o_ref).

    x_ref : [TB, Din_p]  (any float; cast to bf16 in-kernel)
    w_l   : [Din_p_l, Dout_p_l] bf16  (SELU scale pre-folded for l >= 1)
    b_l   : [1, Dout_p_l] f32
    o_ref : [TB, Dout_p_last] f32
    Layers are statically unrolled; intermediate activations live in vregs/VMEM.
    """
    x_ref = refs[0]
    w_refs = refs[1:1 + num_layers]
    b_refs = refs[1 + num_layers:1 + 2 * num_layers]
    o_ref = refs[1 + 2 * num_layers]

    h = x_ref[...].astype(jnp.bfloat16)
    acc = None
    for l in range(num_layers):
        if l > 0:
            # Scale-free SELU; runs in bf16 on v6e/v7x (halves VPU work), f32 on v5e.
            h = _selu_core(acc.astype(act_dtype)).astype(jnp.bfloat16)
        acc = jnp.dot(h, w_refs[l][...],
                      preferred_element_type=jnp.float32)   # bf16 x bf16 -> f32 (MXU)
        acc = acc + b_refs[l][...]                           # [1, Dout_p] broadcast, f32
    o_ref[...] = acc.astype(o_ref.dtype)                     # lane-dense store


def snn_init_params(key, layer_sizes, dtype=jnp.float32):
    """Matches SNN.init: W ~ N(0, sqrt(1/in_features)), b = 0.
    Weights stored as [D_in, D_out] (transpose of PyTorch's [out, in])."""
    params = []
    for d_in, d_out in zip(layer_sizes[:-1], layer_sizes[1:]):
        key, wk = jax.random.split(key)
        w = (jax.random.normal(wk, (d_in, d_out), dtype=jnp.float32)
             * jnp.sqrt(1.0 / d_in)).astype(dtype)
        b = jnp.zeros((d_out,), dtype=dtype)
        params.append((w, b))
    return params


def snn_pack_params(params, input_dim):
    """One-time packing: per-layer 128-padding of each feature dim, SELU scale of the
    previous activation folded into W[l] (l >= 1), weights cast to bf16, biases f32."""
    sizes = [input_dim] + [w.shape[1] for (w, _) in params]
    w_list, b_list = [], []
    for l, (w, b) in enumerate(params):
        din, dout = w.shape
        assert din == sizes[l], "layer sizes must chain"
        din_p, dout_p = _round_up(din, _LANE), _round_up(dout, _LANE)
        scale = SELU_SCALE if l > 0 else 1.0
        wp = jnp.zeros((din_p, dout_p), jnp.bfloat16)
        wp = wp.at[:din, :dout].set((w.astype(jnp.float32) * scale).astype(jnp.bfloat16))
        bp = jnp.zeros((1, dout_p), jnp.float32)
        bp = bp.at[0, :dout].set(b.reshape(-1).astype(jnp.float32))
        w_list.append(wp)
        b_list.append(bp)
    out_dim = params[-1][0].shape[1]
    return tuple(w_list), tuple(b_list), out_dim


def _choose_batch_tile(B, batch_tile):
    """Balance batch tiles (avoid a mostly-padded last tile) and force >= 2 grid steps
    when the batch allows, so ("parallel",) can shard across v7x's 2 TensorCores."""
    n_tiles = max(1, math.ceil(B / batch_tile))
    if n_tiles < 2 and B > 2 * _SUBLANE:
        n_tiles = 2
    tb = _round_up(math.ceil(B / n_tiles), _SUBLANE)
    n_tiles = math.ceil(B / tb)
    return tb, tb * n_tiles, n_tiles


def snn_forward(x, packed, *, batch_tile=512, act_dtype=None):
    """Fused forward pass. x: [B, Din] (any float dtype), returns [B, Dout] f32."""
    w_list, b_list, out_dim = packed
    num_layers = len(w_list)
    B, din = x.shape
    din_p = w_list[0].shape[0]
    dout_p_last = w_list[-1].shape[1]
    if act_dtype is None:
        act_dtype = _default_act_dtype()

    tb, b_pad, n_tiles = _choose_batch_tile(B, batch_tile)

    # Skip the extra HBM pad pass when x is already lane/tile aligned.
    if din == din_p and B == b_pad:
        x_in = x
    else:
        x_in = jnp.pad(x.astype(jnp.bfloat16), ((0, b_pad - B), (0, din_p - din)))

    grid = (n_tiles,)
    kern = functools.partial(_fused_mlp_kernel,
                             num_layers=num_layers, act_dtype=act_dtype)
    x_spec = pl.BlockSpec((tb, din_p), lambda i: (i, 0))
    out_specs = pl.BlockSpec((tb, dout_p_last), lambda i: (i, 0))
    out_shape = jax.ShapeDtypeStruct((b_pad, dout_p_last), jnp.float32)

    w_bytes = sum(int(w.size) * 2 for w in w_list)
    b_bytes = sum(int(b.size) * 4 for b in b_list)
    max_width = max([din_p] + [w.shape[1] for w in w_list])
    cost = pl.CostEstimate(
        flops=2 * b_pad * sum(w.shape[0] * w.shape[1] for w in w_list),
        transcendentals=b_pad * sum(w.shape[1] for w in w_list[:-1]),
        bytes_accessed=(int(x_in.size) * x_in.dtype.itemsize + w_bytes + b_bytes
                        + b_pad * dout_p_last * 4),
    )

    # TODO(synk): if the packed weight set exceeds ~48 MiB (v7x: 64 MiB VMEM/TC),
    # stream weights layer-by-layer (layer grid axis or pltpu.emit_pipeline with
    # double-buffered per-layer tiles) instead of keeping them fully resident.

    def build_and_call(single_buffer_weights):
        resident = dict(pipeline_mode=pl.Buffered(1)) if single_buffer_weights else {}
        w_specs = [pl.BlockSpec(tuple(w.shape), lambda i: (0, 0), **resident)
                   for w in w_list]
        b_specs = [pl.BlockSpec(tuple(b.shape), lambda i: (0, 0), **resident)
                   for b in b_list]
        wbuf = 1 if single_buffer_weights else 2
        vmem_need = (wbuf * (w_bytes + b_bytes)
                     + 2 * (tb * din_p * x_in.dtype.itemsize + tb * dout_p_last * 4)
                     + 4 * tb * max_width * 4)
        vmem_limit = min(max(int(1.5 * vmem_need) + (2 << 20), 16 << 20), 64 << 20)
        return pl.pallas_call(
            kern,
            out_shape=out_shape,
            grid=grid,
            in_specs=[x_spec] + w_specs + b_specs,
            out_specs=out_specs,
            compiler_params=pltpu.CompilerParams(
                dimension_semantics=("parallel",),
                vmem_limit_bytes=vmem_limit),
            cost_estimate=cost,
        )(x_in, *w_list, *b_list)

    try:
        out = build_and_call(single_buffer_weights=True)
    except Exception:
        # Fallback if this JAX build rejects pl.Buffered(1) on pallas_call BlockSpecs.
        out = build_and_call(single_buffer_weights=False)

    return out[:B, :out_dim]


def snn_forward_ref(x, params, act_dtype=jnp.float32):
    """Pure-JAX reference mirroring the kernel precision path (bf16 operands,
    f32 accumulation, SELU scale folded into W, activation computed in act_dtype)."""
    h = x.astype(jnp.bfloat16).astype(jnp.float32)
    for i, (w, b) in enumerate(params):
        if i > 0:
            z = h.astype(act_dtype)
            z = jnp.where(z > 0, z,
                          jnp.asarray(SELU_ALPHA, act_dtype)
                          * (jnp.exp(z) - jnp.asarray(1.0, act_dtype)))
            h = z.astype(jnp.bfloat16).astype(jnp.float32)
        scale = SELU_SCALE if i > 0 else 1.0
        w_eff = (w.astype(jnp.float32) * scale).astype(jnp.bfloat16).astype(jnp.float32)
        h = h @ w_eff + b.reshape(1, -1).astype(jnp.float32)
    return h


if __name__ == "__main__":
    key = jax.random.PRNGKey(0)
    layer_sizes = [32, 64, 48, 16]
    batch = 8

    key, xk, pk = jax.random.split(key, 3)
    x = jax.random.normal(xk, (batch, layer_sizes[0]), dtype=jnp.float32)
    params = snn_init_params(pk, layer_sizes)
    packed = snn_pack_params(params, layer_sizes[0])

    act_dtype = _default_act_dtype()
    out = snn_forward(x, packed, act_dtype=act_dtype)
    out = jax.block_until_ready(out)

    ref = snn_forward_ref(x, params, act_dtype=act_dtype)
    assert out.shape == (batch, layer_sizes[-1])
    assert jnp.allclose(out, ref, atol=2e-2, rtol=2e-2), "mismatch vs reference"

    print("KERNEL_OK")
</pallas_src>

<mosaic_0001>
module attributes {stable_mosaic.version = 11 : i64} {
  func.func @_fused_mlp_kernel(%arg0: i32, %arg1: memref<8x128xbf16, #tpu.memory_space<vmem>>, %arg2: memref<128x128xbf16, #tpu.memory_space<vmem>>, %arg3: memref<128x128xbf16, #tpu.memory_space<vmem>>, %arg4: memref<128x128xbf16, #tpu.memory_space<vmem>>, %arg5: memref<1x128xf32, #tpu.memory_space<vmem>>, %arg6: memref<1x128xf32, #tpu.memory_space<vmem>>, %arg7: memref<1x128xf32, #tpu.memory_space<vmem>>, %arg8: memref<8x128xf32, #tpu.memory_space<vmem>>) attributes {dimension_semantics = [#tpu.dimension_semantics<parallel>], iteration_bounds = array<i64: 1>, scalar_prefetch = 0 : i64, scratch_operands = 0 : i64, tpu.core_type = #tpu.core_type<tc>, window_params = [{transform_indices = @transform_0, window_bounds = array<i64: 8, 128>}, {pipeline_mode = #tpu.pipeline_mode<synchronous>, transform_indices = @transform_1, window_bounds = array<i64: 128, 128>}, {pipeline_mode = #tpu.pipeline_mode<synchronous>, transform_indices = @transform_2, window_bounds = array<i64: 128, 128>}, {pipeline_mode = #tpu.pipeline_mode<synchronous>, transform_indices = @transform_3, window_bounds = array<i64: 128, 128>}, {pipeline_mode = #tpu.pipeline_mode<synchronous>, transform_indices = @transform_4, window_bounds = array<i64: 1, 128>}, {pipeline_mode = #tpu.pipeline_mode<synchronous>, transform_indices = @transform_5, window_bounds = array<i64: 1, 128>}, {pipeline_mode = #tpu.pipeline_mode<synchronous>, transform_indices = @transform_6, window_bounds = array<i64: 1, 128>}, {transform_indices = @transform_7, window_bounds = array<i64: 8, 128>}]} {
    %c0 = arith.constant 0 : index
    %c0_0 = arith.constant 0 : index
    %0 = vector.load %arg1[%c0, %c0_0] : memref<8x128xbf16, #tpu.memory_space<vmem>>, vector<8x128xbf16>
    %c0_1 = arith.constant 0 : index
    %c0_2 = arith.constant 0 : index
    %1 = vector.load %arg2[%c0_1, %c0_2] : memref<128x128xbf16, #tpu.memory_space<vmem>>, vector<128x128xbf16>
    %cst = arith.constant dense<0.000000e+00> : vector<8x128xf32>
    %2 = tpu.matmul %0, %1, %cst {dimension_numbers = #tpu.dot_dimension_numbers<[1], [0], [0], [1], [0, 0, 1, 1], [], []>} : vector<8x128xbf16>, vector<128x128xbf16>, vector<8x128xf32> -> vector<8x128xf32>
    %c0_3 = arith.constant 0 : index
    %c0_4 = arith.constant 0 : index
    %3 = vector.load %arg5[%c0_3, %c0_4] : memref<1x128xf32, #tpu.memory_space<vmem>>, vector<1x128xf32>
    %4 = vector.broadcast %3 : vector<1x128xf32> to vector<8x128xf32>
    %5 = arith.addf %2, %4 : vector<8x128xf32>
    %6 = arith.truncf %5 : vector<8x128xf32> to vector<8x128xbf16>
    %cst_5 = arith.constant 0.000000e+00 : bf16
    %7 = vector.broadcast %cst_5 : bf16 to vector<8x128xbf16>
    %8 = arith.cmpf ogt, %6, %7 : vector<8x128xbf16>
    %9 = math.exp %6 : vector<8x128xbf16>
    %cst_6 = arith.constant 1.000000e+00 : bf16
    %10 = vector.broadcast %cst_6 : bf16 to vector<8x128xbf16>
    %11 = arith.subf %9, %10 : vector<8x128xbf16>
    %cst_7 = arith.constant 1.671880e+00 : bf16
    %12 = vector.broadcast %cst_7 : bf16 to vector<8x128xbf16>
    %13 = arith.mulf %12, %11 : vector<8x128xbf16>
    %14 = arith.select %8, %6, %13 : vector<8x128xi1>, vector<8x128xbf16>
    %c0_8 = arith.constant 0 : index
    %c0_9 = arith.constant 0 : index
    %15 = vector.load %arg3[%c0_8, %c0_9] : memref<128x128xbf16, #tpu.memory_space<vmem>>, vector<128x128xbf16>
    %cst_10 = arith.constant dense<0.000000e+00> : vector<8x128xf32>
    %16 = tpu.matmul %14, %15, %cst_10 {dimension_numbers = #tpu.dot_dimension_numbers<[1], [0], [0], [1], [0, 0, 1, 1], [], []>} : vector<8x128xbf16>, vector<128x128xbf16>, vector<8x128xf32> -> vector<8x128xf32>
    %c0_11 = arith.constant 0 : index
    %c0_12 = arith.constant 0 : index
    %17 = vector.load %arg6[%c0_11, %c0_12] : memref<1x128xf32, #tpu.memory_space<vmem>>, vector<1x128xf32>
    %18 = vector.broadcast %17 : vector<1x128xf32> to vector<8x128xf32>
    %19 = arith.addf %16, %18 : vector<8x128xf32>
    %20 = arith.truncf %19 : vector<8x128xf32> to vector<8x128xbf16>
    %cst_13 = arith.constant 0.000000e+00 : bf16
    %21 = vector.broadcast %cst_13 : bf16 to vector<8x128xbf16>
    %22 = arith.cmpf ogt, %20, %21 : vector<8x128xbf16>
    %23 = math.exp %20 : vector<8x128xbf16>
    %cst_14 = arith.constant 1.000000e+00 : bf16
    %24 = vector.broadcast %cst_14 : bf16 to vector<8x128xbf16>
    %25 = arith.subf %23, %24 : vector<8x128xbf16>
    %cst_15 = arith.constant 1.671880e+00 : bf16
    %26 = vector.broadcast %cst_15 : bf16 to vector<8x128xbf16>
    %27 = arith.mulf %26, %25 : vector<8x128xbf16>
    %28 = arith.select %22, %20, %27 : vector<8x128xi1>, vector<8x128xbf16>
    %c0_16 = arith.constant 0 : index
    %c0_17 = arith.constant 0 : index
    %29 = vector.load %arg4[%c0_16, %c0_17] : memref<128x128xbf16, #tpu.memory_space<vmem>>, vector<128x128xbf16>
    %cst_18 = arith.constant dense<0.000000e+00> : vector<8x128xf32>
    %30 = tpu.matmul %28, %29, %cst_18 {dimension_numbers = #tpu.dot_dimension_numbers<[1], [0], [0], [1], [0, 0, 1, 1], [], []>} : vector<8x128xbf16>, vector<128x128xbf16>, vector<8x128xf32> -> vector<8x128xf32>
    %c0_19 = arith.constant 0 : index
    %c0_20 = arith.constant 0 : index
    %31 = vector.load %arg7[%c0_19, %c0_20] : memref<1x128xf32, #tpu.memory_space<vmem>>, vector<1x128xf32>
    %32 = vector.broadcast %31 : vector<1x128xf32> to vector<8x128xf32>
    %33 = arith.addf %30, %32 : vector<8x128xf32>
    %c0_21 = arith.constant 0 : index
    %c0_22 = arith.constant 0 : index
    %34 = vector.load %arg8[%c0_21, %c0_22] : memref<8x128xf32, #tpu.memory_space<vmem>>, vector<8x128xf32>
    tpu.vector_store %arg8[%c0_21, %c0_22], %33 {strides = array<i32>} : memref<8x128xf32, #tpu.memory_space<vmem>>, vector<8x128xf32>,
    return
  }
  func.func @transform_0(%arg0: i32) -> (i32, i32) {
    %c0_i32 = arith.constant 0 : i32
    %c0_i32_0 = arith.constant 0 : i32
    return %arg0, %c0_i32 : i32, i32
  }
  func.func @transform_1(%arg0: i32) -> (i32, i32) {
    %c0_i32 = arith.constant 0 : i32
    %c0_i32_0 = arith.constant 0 : i32
    %c0_i32_1 = arith.constant 0 : i32
    return %c0_i32, %c0_i32_0 : i32, i32
  }
  func.func @transform_2(%arg0: i32) -> (i32, i32) {
    %c0_i32 = arith.constant 0 : i32
    %c0_i32_0 = arith.constant 0 : i32
    %c0_i32_1 = arith.constant 0 : i32
    return %c0_i32, %c0_i32_0 : i32, i32
  }
  func.func @transform_3(%arg0: i32) -> (i32, i32) {
    %c0_i32 = arith.constant 0 : i32
    %c0_i32_0 = arith.constant 0 : i32
    %c0_i32_1 = arith.constant 0 : i32
    return %c0_i32, %c0_i32_0 : i32, i32
  }
  func.func @transform_4(%arg0: i32) -> (i32, i32) {
    %c0_i32 = arith.constant 0 : i32
    %c0_i32_0 = arith.constant 0 : i32
    %c0_i32_1 = arith.constant 0 : i32
    return %c0_i32, %c0_i32_0 : i32, i32
  }
  func.func @transform_5(%arg0: i32) -> (i32, i32) {
    %c0_i32 = arith.constant 0 : i32
    %c0_i32_0 = arith.constant 0 : i32
    %c0_i32_1 = arith.constant 0 : i32
    return %c0_i32, %c0_i32_0 : i32, i32
  }
  func.func @transform_6(%arg0: i32) -> (i32, i32) {
    %c0_i32 = arith.constant 0 : i32
    %c0_i32_0 = arith.constant 0 : i32
    %c0_i32_1 = arith.constant 0 : i32
    return %c0_i32, %c0_i32_0 : i32, i32
  }
  func.func @transform_7(%arg0: i32) -> (i32, i32) {
    %c0_i32 = arith.constant 0 : i32
    %c0_i32_0 = arith.constant 0 : i32
    return %arg0, %c0_i32 : i32, i32
  }
}

module attributes {stable_mosaic.version = 11 : i64} {
  func.func @_fused_mlp_kernel(%arg0: i32, %arg1: memref<8x128xbf16, #tpu.memory_space<vmem>>, %arg2: memref<128x128xbf16, #tpu.memory_space<vmem>>, %arg3: memref<128x128xbf16, #tpu.memory_space<vmem>>, %arg4: memref<128x128xbf16, #tpu.memory_space<vmem>>, %arg5: memref<1x128xf32, #tpu.memory_space<vmem>>, %arg6: memref<1x128xf32, #tpu.memory_space<vmem>>, %arg7: memref<1x128xf32, #tpu.memory_space<vmem>>, %arg8: memref<8x128xf32, #tpu.memory_space<vmem>>) attributes {dimension_semantics = [#tpu.dimension_semantics<parallel>], iteration_bounds = array<i64: 1>, scalar_prefetch = 0 : i64, scratch_operands = 0 : i64, tpu.core_type = #tpu.core_type<tc>, window_params = [{transform_indices = @transform_0, window_bounds = array<i64: 8, 128>}, {pipeline_mode = #tpu.pipeline_mode<synchronous>, transform_indices = @transform_1, window_bounds = array<i64: 128, 128>}, {pipeline_mode = #tpu.pipeline_mode<synchronous>, transform_indices = @transform_2, window_bounds = array<i64: 128, 128>}, {pipeline_mode = #tpu.pipeline_mode<synchronous>, transform_indices = @transform_3, window_bounds = array<i64: 128, 128>}, {pipeline_mode = #tpu.pipeline_mode<synchronous>, transform_indices = @transform_4, window_bounds = array<i64: 1, 128>}, {pipeline_mode = #tpu.pipeline_mode<synchronous>, transform_indices = @transform_5, window_bounds = array<i64: 1, 128>}, {pipeline_mode = #tpu.pipeline_mode<synchronous>, transform_indices = @transform_6, window_bounds = array<i64: 1, 128>}, {transform_indices = @transform_7, window_bounds = array<i64: 8, 128>}]} {
    %c0 = arith.constant 0 : index
    %c0_0 = arith.constant 0 : index
    %0 = vector.load %arg1[%c0, %c0_0] : memref<8x128xbf16, #tpu.memory_space<vmem>>, vector<8x128xbf16>
    %c0_1 = arith.constant 0 : index
    %c0_2 = arith.constant 0 : index
    %1 = vector.load %arg2[%c0_1, %c0_2] : memref<128x128xbf16, #tpu.memory_space<vmem>>, vector<128x128xbf16>
    %cst = arith.constant dense<0.000000e+00> : vector<8x128xf32>
    %2 = tpu.matmul %0, %1, %cst {dimension_numbers = #tpu.dot_dimension_numbers<[1], [0], [0], [1], [0, 0, 1, 1], [], []>} : vector<8x128xbf16>, vector<128x128xbf16>, vector<8x128xf32> -> vector<8x128xf32>
    %c0_3 = arith.constant 0 : index
    %c0_4 = arith.constant 0 : index
    %3 = vector.load %arg5[%c0_3, %c0_4] : memref<1x128xf32, #tpu.memory_space<vmem>>, vector<1x128xf32>
    %4 = vector.broadcast %3 : vector<1x128xf32> to vector<8x128xf32>
    %5 = arith.addf %2, %4 : vector<8x128xf32>
    %6 = arith.truncf %5 : vector<8x128xf32> to vector<8x128xbf16>
    %cst_5 = arith.constant 0.000000e+00 : bf16
    %7 = vector.broadcast %cst_5 : bf16 to vector<8x128xbf16>
    %8 = arith.cmpf ogt, %6, %7 : vector<8x128xbf16>
    %9 = math.exp %6 : vector<8x128xbf16>
    %cst_6 = arith.constant 1.000000e+00 : bf16
    %10 = vector.broadcast %cst_6 : bf16 to vector<8x128xbf16>
    %11 = arith.subf %9, %10 : vector<8x128xbf16>
    %cst_7 = arith.constant 1.671880e+00 : bf16
    %12 = vector.broadcast %cst_7 : bf16 to vector<8x128xbf16>
    %13 = arith.mulf %12, %11 : vector<8x128xbf16>
    %14 = arith.select %8, %6, %13 : vector<8x128xi1>, vector<8x128xbf16>
    %c0_8 = arith.constant 0 : index
    %c0_9 = arith.constant 0 : index
    %15 = vector.load %arg3[%c0_8, %c0_9] : memref<128x128xbf16, #tpu.memory_space<vmem>>, vector<128x128xbf16>
    %cst_10 = arith.constant dense<0.000000e+00> : vector<8x128xf32>
    %16 = tpu.matmul %14, %15, %cst_10 {dimension_numbers = #tpu.dot_dimension_numbers<[1], [0], [0], [1], [0, 0, 1, 1], [], []>} : vector<8x128xbf16>, vector<128x128xbf16>, vector<8x128xf32> -> vector<8x128xf32>
    %c0_11 = arith.constant 0 : index
    %c0_12 = arith.constant 0 : index
    %17 = vector.load %arg6[%c0_11, %c0_12] : memref<1x128xf32, #tpu.memory_space<vmem>>, vector<1x128xf32>
    %18 = vector.broadcast %17 : vector<1x128xf32> to vector<8x128xf32>
    %19 = arith.addf %16, %18 : vector<8x128xf32>
    %20 = arith.truncf %19 : vector<8x128xf32> to vector<8x128xbf16>
    %cst_13 = arith.constant 0.000000e+00 : bf16
    %21 = vector.broadcast %cst_13 : bf16 to vector<8x128xbf16>
    %22 = arith.cmpf ogt, %20, %21 : vector<8x128xbf16>
    %23 = math.exp %20 : vector<8x128xbf16>
    %cst_14 = arith.constant 1.000000e+00 : bf16
    %24 = vector.broadcast %cst_14 : bf16 to vector<8x128xbf16>
    %25 = arith.subf %23, %24 : vector<8x128xbf16>
    %cst_15 = arith.constant 1.671880e+00 : bf16
    %26 = vector.broadcast %cst_15 : bf16 to vector<8x128xbf16>
    %27 = arith.mulf %26, %25 : vector<8x128xbf16>
    %28 = arith.select %22, %20, %27 : vector<8x128xi1>, vector<8x128xbf16>
    %c0_16 = arith.constant 0 : index
    %c0_17 = arith.constant 0 : index
    %29 = vector.load %arg4[%c0_16, %c0_17] : memref<128x128xbf16, #tpu.memory_space<vmem>>, vector<128x128xbf16>
    %cst_18 = arith.constant dense<0.000000e+00> : vector<8x128xf32>
    %30 = tpu.matmul %28, %29, %cst_18 {dimension_numbers = #tpu.dot_dimension_numbers<[1], [0], [0], [1], [0, 0, 1, 1], [], []>} : vector<8x128xbf16>, vector<128x128xbf16>, vector<8x128xf32> -> vector<8x128xf32>
    %c0_19 = arith.constant 0 : index
    %c0_20 = arith.constant 0 : index
    %31 = vector.load %arg7[%c0_19, %c0_20] : memref<1x128xf32, #tpu.memory_space<vmem>>, vector<1x128xf32>
    %32 = vector.broadcast %31 : vector<1x128xf32> to vector<8x128xf32>
    %33 = arith.addf %30, %32 : vector<8x128xf32>
    %c0_21 = arith.constant 0 : index
    %c0_22 = arith.constant 0 : index
    %34 = vector.load %arg8[%c0_21, %c0_22] : memref<8x128xf32, #tpu.memory_space<vmem>>, vector<8x128xf32>
    tpu.vector_store %arg8[%c0_21, %c0_22], %33 {strides = array<i32>} : memref<8x128xf32, #tpu.memory_space<vmem>>, vector<8x128xf32>,
    return
  }
  func.func @transform_0(%arg0: i32) -> (i32, i32) {
    %c0_i32 = arith.constant 0 : i32
    %c0_i32_0 = arith.constant 0 : i32
    return %arg0, %c0_i32 : i32, i32
  }
  func.func @transform_1(%arg0: i32) -> (i32, i32) {
    %c0_i32 = arith.constant 0 : i32
    %c0_i32_0 = arith.constant 0 : i32
    %c0_i32_1 = arith.constant 0 : i32
    return %c0_i32, %c0_i32_0 : i32, i32
  }
  func.func @transform_2(%arg0: i32) -> (i32, i32) {
    %c0_i32 = arith.constant 0 : i32
    %c0_i32_0 = arith.constant 0 : i32
    %c0_i32_1 = arith.constant 0 : i32
    return %c0_i32, %c0_i32_0 : i32, i32
  }
  func.func @transform_3(%arg0: i32) -> (i32, i32) {
    %c0_i32 = arith.constant 0 : i32
    %c0_i32_0 = arith.constant 0 : i32
    %c0_i32_1 = arith.constant 0 : i32
    return %c0_i32, %c0_i32_0 : i32, i32
  }
  func.func @transform_4(%arg0: i32) -> (i32, i32) {
    %c0_i32 = arith.constant 0 : i32
    %c0_i32_0 = arith.constant 0 : i32
    %c0_i32_1 = arith.constant 0 : i32
    return %c0_i32, %c0_i32_0 : i32, i32
  }
  func.func @transform_5(%arg0: i32) -> (i32, i32) {
    %c0_i32 = arith.constant 0 : i32
    %c0_i32_0 = arith.constant 0 : i32
    %c0_i32_1 = arith.constant 0 : i32
    return %c0_i32, %c0_i32_0 : i32, i32
  }
  func.func @transform_6(%arg0: i32) -> (i32, i32) {
    %c0_i32 = arith.constant 0 : i32
    %c0_i32_0 = arith.constant 0 : i32
    %c0_i32_1 = arith.constant 0 : i32
    return %c0_i32, %c0_i32_0 : i32, i32
  }
  func.func @transform_7(%arg0: i32) -> (i32, i32) {
    %c0_i32 = arith.constant 0 : i32
    %c0_i32_0 = arith.constant 0 : i32
    return %arg0, %c0_i32 : i32, i32
  }
}

</mosaic_0001>

<llo_original>
// kernel: tpu_custom_call.1
$region0: #{tpu_custom_call.1}
  #allocation0 [shape = 'u32[]', space=smem, size = 0x4, offset = 0x4, fixed_abs, tag = 'smem constant byte address 0x4 - core index']
  #allocation1 [shape = 'u32[144,128]{1,0:T(1,128)}', space=vmem, size = 0x12000, scoped, tag = 'internal scratch']
  %s0 = inlined_call_operand.hbm [shape: bf16[8,128], index: 0, kind: input, shape index: {}]
  %s1 = inlined_call_operand.hbm [shape: bf16[128,128], index: 1, kind: input, shape index: {}]
  %s2 = inlined_call_operand.hbm [shape: bf16[128,128], index: 2, kind: input, shape index: {}]
  %s3 = inlined_call_operand.hbm [shape: bf16[128,128], index: 3, kind: input, shape index: {}]
  %s4 = inlined_call_operand.vmem [shape: f32[1,128], index: 4, kind: input, shape index: {}]
  %s5 = inlined_call_operand.vmem [shape: f32[1,128], index: 5, kind: input, shape index: {}]
  %s6 = inlined_call_operand.vmem [shape: f32[1,128], index: 6, kind: input, shape index: {}]
  %s7 = inlined_call_operand.hbm [shape: f32[8,128], index: 7, kind: output, shape index: {}]
  %s8 = sld [smem:[#allocation0]]
  $region54: #{tpu_custom_call.1} parent=0
    _
  %s10 = ssub.s32 1, %s8
  %s11 = scalar_select 0, %s10, %s8
  $region1: #{tpu_custom_call.1} parent=0
    #allocation2 [shape = 'u8[2048]{0}', space=vmem, size = 0x800, scoped, tag = 'input window, operand 0, single buffered']
    #allocation3 [shape = 's32[1]{0}', space=sflag, size = 0x4, scoped, tag = 'scoped memory for tpu_custom_call.1']
    #allocation4 [shape = 's32[1]{0}', space=sflag, size = 0x4, scoped, tag = 'scoped memory for tpu_custom_call.1']
    #allocation5 [shape = 'u8[32768]{0}', space=vmem, size = 0x8000, scoped, tag = 'input window, operand 1, single buffered']
    #allocation6 [shape = 's32[1]{0}', space=sflag, size = 0x4, scoped, tag = 'scoped memory for tpu_custom_call.1']
    #allocation7 [shape = 'u8[32768]{0}', space=vmem, size = 0x8000, scoped, tag = 'input window, operand 2, single buffered']
    #allocation8 [shape = 'u8[32768]{0}', space=vmem, size = 0x8000, scoped, tag = 'input window, operand 3, single buffered']
    #allocation9 [shape = 's32[1]{0}', space=sflag, size = 0x4, scoped, tag = 'scoped memory for tpu_custom_call.1']
    #allocation10 [shape = 'u8[4096]{0}', space=vmem, size = 0x1000, scoped, tag = 'output window, operand 0, single buffered']
    %12 = vsyncpa [#allocation3], 0
    %13 = vsyncpa [#allocation6], 0
    %14 = vsyncpa [#allocation9], 0
    %15 = vsyncpa [#allocation4], 0
    // Predicated region
    $region2: #{tpu_custom_call.1} parent=1 // pred_check
      _
    $region3: #{tpu_custom_call.1} parent=1 // pred_check_branch
      %17 = sbr.rel (0) target = $region5
    $region4: #{tpu_custom_call.1} parent=1 // pred_region
      %s19 = ssub.s32 64, 64
      %20 = vsyncadd [#allocation3], %s19
      %s22 = sshll.u32 [#allocation2], 4
      %s23 = int_to_ptr.vmem [resolvable:$true] %s22
      %25 = dma.hbm_to_vmem [thread:$0]  %s0, 64, %s23, [#allocation3]
    $region5: #{tpu_custom_call.1} parent=1 // pred_fallthru
      _
    // Predicated region
    $region6: #{tpu_custom_call.1} parent=1 // pred_check
      _
    $region7: #{tpu_custom_call.1} parent=1 // pred_check_branch
      %27 = sbr.rel (0) target = $region9
    $region8: #{tpu_custom_call.1} parent=1 // pred_region
      %s29 = ssub.s32 1024, 1024
      %30 = vsyncadd [#allocation6], %s29
      %s31 = sshll.u32 [#allocation5], 4
      %s32 = int_to_ptr.vmem [resolvable:$true] %s31
      %37 = dma.hbm_to_vmem [thread:$0]  %s1, 1024, %s32, [#allocation6], 64, 64, 4
    $region9: #{tpu_custom_call.1} parent=1 // pred_fallthru
      _
    // Predicated region
    $region10: #{tpu_custom_call.1} parent=1 // pred_check
      _
    $region11: #{tpu_custom_call.1} parent=1 // pred_check_branch
      %39 = sbr.rel (0) target = $region13
    $region12: #{tpu_custom_call.1} parent=1 // pred_region
      %s41 = ssub.s32 1024, 1024
      %42 = vsyncadd [#allocation6], %s41
      %s43 = sshll.u32 [#allocation7], 4
      %s44 = int_to_ptr.vmem [resolvable:$true] %s43
      %49 = dma.hbm_to_vmem [thread:$0]  %s2, 1024, %s44, [#allocation6], 64, 64, 4
    $region13: #{tpu_custom_call.1} parent=1 // pred_fallthru
      _
    // Predicated region
    $region14: #{tpu_custom_call.1} parent=1 // pred_check
      _
    $region15: #{tpu_custom_call.1} parent=1 // pred_check_branch
      %51 = sbr.rel (0) target = $region17
    $region16: #{tpu_custom_call.1} parent=1 // pred_region
      %s53 = ssub.s32 1024, 1024
      %54 = vsyncadd [#allocation9], %s53
      %s55 = sshll.u32 [#allocation8], 4
      %s56 = int_to_ptr.vmem [resolvable:$true] %s55
      %61 = dma.hbm_to_vmem [thread:$0]  %s3, 1024, %s56, [#allocation9], 64, 64, 4
    $region17: #{tpu_custom_call.1} parent=1 // pred_fallthru
      _
    // Predicated region
    $region18: #{tpu_custom_call.1} parent=1 // pred_check
      _
    $region19: #{tpu_custom_call.1} parent=1 // pred_check_branch
      %63 = sbr.rel (0) target = $region21
    $region20: #{tpu_custom_call.1} parent=1 // pred_region
      _
    $region21: #{tpu_custom_call.1} parent=1 // pred_fallthru
      _
    // Predicated region
    $region22: #{tpu_custom_call.1} parent=1 // pred_check
      _
    $region23: #{tpu_custom_call.1} parent=1 // pred_check_branch
      %65 = sbr.rel (0) target = $region25
    $region24: #{tpu_custom_call.1} parent=1 // pred_region
      _
    $region25: #{tpu_custom_call.1} parent=1 // pred_fallthru
      _
    // Predicated region
    $region26: #{tpu_custom_call.1} parent=1 // pred_check
      _
    $region27: #{tpu_custom_call.1} parent=1 // pred_check_branch
      %67 = sbr.rel (0) target = $region29
    $region28: #{tpu_custom_call.1} parent=1 // pred_region
      _
    $region29: #{tpu_custom_call.1} parent=1 // pred_fallthru
      _
    // Predicated region
    $region30: #{tpu_custom_call.1} parent=1 // pred_check
      _
    $region31: #{tpu_custom_call.1} parent=1 // pred_check_branch
      %69 = sbr.rel (0) target = $region33
    $region32: #{tpu_custom_call.1} parent=1 // pred_region
      %70 = dma.done [#allocation3], 64
    $region33: #{tpu_custom_call.1} parent=1 // pred_fallthru
      _
    // Predicated region
    $region34: #{tpu_custom_call.1} parent=1 // pred_check
      _
    $region35: #{tpu_custom_call.1} parent=1 // pred_check_branch
      %72 = sbr.rel (0) target = $region37
    $region36: #{tpu_custom_call.1} parent=1 // pred_region
      %73 = dma.done [#allocation6], 1024
    $region37: #{tpu_custom_call.1} parent=1 // pred_fallthru
      _
    // Predicated region
    $region38: #{tpu_custom_call.1} parent=1 // pred_check
      _
    $region39: #{tpu_custom_call.1} parent=1 // pred_check_branch
      %75 = sbr.rel (0) target = $region41
    $region40: #{tpu_custom_call.1} parent=1 // pred_region
      %76 = dma.done [#allocation6], 1024
    $region41: #{tpu_custom_call.1} parent=1 // pred_fallthru
      _
    // Predicated region
    $region42: #{tpu_custom_call.1} parent=1 // pred_check
      _
    $region43: #{tpu_custom_call.1} parent=1 // pred_check_branch
      %78 = sbr.rel (0) target = $region45
    $region44: #{tpu_custom_call.1} parent=1 // pred_region
      %79 = dma.done [#allocation9], 1024
    $region45: #{tpu_custom_call.1} parent=1 // pred_fallthru
      _
    %v83 = vld [vmem:[#allocation2] sm:$0xf]
    %v84 = vld [vmem:[#allocation5] sm:$0xf]
    %v85 = vld [vmem:[#allocation5 + $0x4] sm:$0xf]
    %v86 = vld [vmem:[#allocation5 + $0x8] sm:$0xf]
    %v87 = vld [vmem:[#allocation5 + $0xc] sm:$0xf]
    %v88 = vld [vmem:[#allocation5 + $0x10] sm:$0xf]
    %v89 = vld [vmem:[#allocation5 + $0x14] sm:$0xf]
    %v90 = vld [vmem:[#allocation5 + $0x18] sm:$0xf]
    %v91 = vld [vmem:[#allocation5 + $0x1c] sm:$0xf]
    %v92 = vld [vmem:[#allocation5 + $0x20] sm:$0xf]
    %v93 = vld [vmem:[#allocation5 + $0x24] sm:$0xf]
    %v94 = vld [vmem:[#allocation5 + $0x28] sm:$0xf]
    %v95 = vld [vmem:[#allocation5 + $0x2c] sm:$0xf]
    %v96 = vld [vmem:[#allocation5 + $0x30] sm:$0xf]
    %v97 = vld [vmem:[#allocation5 + $0x34] sm:$0xf]
    %v98 = vld [vmem:[#allocation5 + $0x38] sm:$0xf]
    %v99 = vld [vmem:[#allocation5 + $0x3c] sm:$0xf]
    %v100 = vld [vmem:[%s4] sm:$0x1]
    %v102 = vlaneseq
    %v103 = vshrl.u32 %v102, 7
    %v104 = vsub.s32 0, %v103
    %v105 = vrot.slane %v100, %v104
    %v123 = vunpack.c.l.b16 %v84
    %v124 = vunpack.c.l.b16 %v85
    %v125 = vunpack.c.l.b16 %v86
    %v126 = vunpack.c.l.b16 %v87
    %v127 = vunpack.c.l.b16 %v88
    %v128 = vunpack.c.l.b16 %v89
    %v129 = vunpack.c.l.b16 %v90
    %v130 = vunpack.c.l.b16 %v91
    %v131 = vunpack.c.l.b16 %v92
    %v132 = vunpack.c.l.b16 %v93
    %v133 = vunpack.c.l.b16 %v94
    %v134 = vunpack.c.l.b16 %v95
    %v135 = vunpack.c.l.b16 %v96
    %v136 = vunpack.c.l.b16 %v97
    %v137 = vunpack.c.l.b16 %v98
    %v138 = vunpack.c.l.b16 %v99
    %v139 = vpack.c.b16 %v124, %v123
    %v140 = vpack.c.b16 %v126, %v125
    %v141 = vpack.c.b16 %v128, %v127
    %v142 = vpack.c.b16 %v130, %v129
    %v143 = vpack.c.b16 %v132, %v131
    %v144 = vpack.c.b16 %v134, %v133
    %v145 = vpack.c.b16 %v136, %v135
    %v146 = vpack.c.b16 %v138, %v137
    %155 = vmatprep.subr.bf16.mxu0 0
    %156 = vmatpush1.bf16.msra.mxu0 %v139
    %157 = vmatprep.subr.bf16.mxu0 0
    %158 = vmatpush1.bf16.msra.mxu0 %v140
    %159 = vmatprep.subr.bf16.mxu0 0
    %160 = vmatpush1.bf16.msra.mxu0 %v141
    %161 = vmatprep.subr.bf16.mxu0 0
    %162 = vmatpush1.bf16.msra.mxu0 %v142
    %163 = vmatprep.subr.bf16.mxu0 0
    %164 = vmatpush1.bf16.msra.mxu0 %v143
    %165 = vmatprep.subr.bf16.mxu0 0
    %166 = vmatpush1.bf16.msra.mxu0 %v144
    %167 = vmatprep.subr.bf16.mxu0 0
    %168 = vmatpush1.bf16.msra.mxu0 %v145
    %169 = vmatprep.subr.bf16.mxu0 0
    %170 = vmatpush1.bf16.msra.mxu0 %v146
    %171 = vmatprep.subr.bf16.mxu0 0
    %172 = vmatpush1.bf16.msra.mxu0 0
    %173 = vmatprep.subr.bf16.mxu0 0
    %174 = vmatpush1.bf16.msra.mxu0 0
    %175 = vmatprep.subr.bf16.mxu0 0
    %176 = vmatpush1.bf16.msra.mxu0 0
    %177 = vmatprep.subr.bf16.mxu0 0
    %178 = vmatpush1.bf16.msra.mxu0 0
    %179 = vmatprep.subr.bf16.mxu0 0
    %180 = vmatpush1.bf16.msra.mxu0 0
    %181 = vmatprep.subr.bf16.mxu0 0
    %182 = vmatpush1.bf16.msra.mxu0 0
    %183 = vmatprep.subr.bf16.mxu0 0
    %184 = vmatpush1.bf16.msra.mxu0 0
    %185 = vmatprep.subr.bf16.mxu0 0
    %186 = vmatpush1.bf16.msra.mxu0 0
    %187 = vmatprep.mubr.bf16.mxu0 0
    %188 = vmatmul.mubr.bf16.gmra.mrb[0].mxu0 %v83
    %v189 = vpop.f32.mrb[0].mxu0
    %v190 = vadd.f32 %v105, %v189
    %v191 = vpop.f32.mrb[0].mxu0
    %v192 = vpop.f32.mrb[0].mxu0
    %v193 = vpop.f32.mrb[0].mxu0
    %194 = vdwg.mxu0
    %v195 = vpack.c.bf16 %v190, %v190
    %vm196 = vcmp.gt.bf16.partialorder %v195, 0
    %v198 = vmul.bf16 %v195, 1069105081
    %v199 = vpow.bf16.pop %v198
    %v200 = vsub.bf16 %v199, 1065369472
    %v201 = vmul.bf16 %v200, 1071005654
    %v202 = vsel %vm196, %v195, %v201
    %v203 = vld [vmem:[#allocation7] sm:$0xf]
    %v204 = vld [vmem:[#allocation7 + $0x4] sm:$0xf]
    %v205 = vld [vmem:[#allocation7 + $0x8] sm:$0xf]
    %v206 = vld [vmem:[#allocation7 + $0xc] sm:$0xf]
    %v207 = vld [vmem:[#allocation7 + $0x10] sm:$0xf]
    %v208 = vld [vmem:[#allocation7 + $0x14] sm:$0xf]
    %v209 = vld [vmem:[#allocation7 + $0x18] sm:$0xf]
    %v210 = vld [vmem:[#allocation7 + $0x1c] sm:$0xf]
    %v211 = vld [vmem:[#allocation7 + $0x20] sm:$0xf]
    %v212 = vld [vmem:[#allocation7 + $0x24] sm:$0xf]
    %v213 = vld [vmem:[#allocation7 + $0x28] sm:$0xf]
    %v214 = vld [vmem:[#allocation7 + $0x2c] sm:$0xf]
    %v215 = vld [vmem:[#allocation7 + $0x30] sm:$0xf]
    %v216 = vld [vmem:[#allocation7 + $0x34] sm:$0xf]
    %v217 = vld [vmem:[#allocation7 + $0x38] sm:$0xf]
    %v218 = vld [vmem:[#allocation7 + $0x3c] sm:$0xf]
    %v219 = vld [vmem:[%s5] sm:$0x1]
    %v221 = vlaneseq
    %v222 = vshrl.u32 %v221, 7
    %v223 = vsub.s32 0, %v222
    %v224 = vrot.slane %v219, %v223
    %v242 = vunpack.c.l.b16 %v203
    %v243 = vunpack.c.l.b16 %v204
    %v244 = vunpack.c.l.b16 %v205
    %v245 = vunpack.c.l.b16 %v206
    %v246 = vunpack.c.l.b16 %v207
    %v247 = vunpack.c.l.b16 %v208
    %v248 = vunpack.c.l.b16 %v209
    %v249 = vunpack.c.l.b16 %v210
    %v250 = vunpack.c.l.b16 %v211
    %v251 = vunpack.c.l.b16 %v212
    %v252 = vunpack.c.l.b16 %v213
    %v253 = vunpack.c.l.b16 %v214
    %v254 = vunpack.c.l.b16 %v215
    %v255 = vunpack.c.l.b16 %v216
    %v256 = vunpack.c.l.b16 %v217
    %v257 = vunpack.c.l.b16 %v218
    %v258 = vpack.c.b16 %v243, %v242
    %v259 = vpack.c.b16 %v245, %v244
    %v260 = vpack.c.b16 %v247, %v246
    %v261 = vpack.c.b16 %v249, %v248
    %v262 = vpack.c.b16 %v251, %v250
    %v263 = vpack.c.b16 %v253, %v252
    %v264 = vpack.c.b16 %v255, %v254
    %v265 = vpack.c.b16 %v257, %v256
    %274 = vmatprep.subr.bf16.mxu0 0
    %275 = vmatpush1.bf16.msra.mxu0 %v258
    %276 = vmatprep.subr.bf16.mxu0 0
    %277 = vmatpush1.bf16.msra.mxu0 %v259
    %278 = vmatprep.subr.bf16.mxu0 0
    %279 = vmatpush1.bf16.msra.mxu0 %v260
    %280 = vmatprep.subr.bf16.mxu0 0
    %281 = vmatpush1.bf16.msra.mxu0 %v261
    %282 = vmatprep.subr.bf16.mxu0 0
    %283 = vmatpush1.bf16.msra.mxu0 %v262
    %284 = vmatprep.subr.bf16.mxu0 0
    %285 = vmatpush1.bf16.msra.mxu0 %v263
    %286 = vmatprep.subr.bf16.mxu0 0
    %287 = vmatpush1.bf16.msra.mxu0 %v264
    %288 = vmatprep.subr.bf16.mxu0 0
    %289 = vmatpush1.bf16.msra.mxu0 %v265
    %290 = vmatprep.subr.bf16.mxu0 0
    %291 = vmatpush1.bf16.msra.mxu0 0
    %292 = vmatprep.subr.bf16.mxu0 0
    %293 = vmatpush1.bf16.msra.mxu0 0
    %294 = vmatprep.subr.bf16.mxu0 0
    %295 = vmatpush1.bf16.msra.mxu0 0
    %296 = vmatprep.subr.bf16.mxu0 0
    %297 = vmatpush1.bf16.msra.mxu0 0
    %298 = vmatprep.subr.bf16.mxu0 0
    %299 = vmatpush1.bf16.msra.mxu0 0
    %300 = vmatprep.subr.bf16.mxu0 0
    %301 = vmatpush1.bf16.msra.mxu0 0
    %302 = vmatprep.subr.bf16.mxu0 0
    %303 = vmatpush1.bf16.msra.mxu0 0
    %304 = vmatprep.subr.bf16.mxu0 0
    %305 = vmatpush1.bf16.msra.mxu0 0
    %306 = vmatprep.mubr.bf16.mxu0 0
    %307 = vmatmul.mubr.bf16.gmra.mrb[0].mxu0 %v202
    %v308 = vpop.f32.mrb[0].mxu0
    %v309 = vadd.f32 %v224, %v308
    %v310 = vpop.f32.mrb[0].mxu0
    %v311 = vpop.f32.mrb[0].mxu0
    %v312 = vpop.f32.mrb[0].mxu0
    %313 = vdwg.mxu0
    %v314 = vpack.c.bf16 %v309, %v309
    %vm315 = vcmp.gt.bf16.partialorder %v314, 0
    %v317 = vmul.bf16 %v314, 1069105081
    %v318 = vpow.bf16.pop %v317
    %v319 = vsub.bf16 %v318, 1065369472
    %v320 = vmul.bf16 %v319, 1071005654
    %v321 = vsel %vm315, %v314, %v320
    %v322 = vld [vmem:[#allocation8] sm:$0xf]
    %v323 = vld [vmem:[#allocation8 + $0x4] sm:$0xf]
    %v324 = vld [vmem:[#allocation8 + $0x8] sm:$0xf]
    %v325 = vld [vmem:[#allocation8 + $0xc] sm:$0xf]
    %v326 = vld [vmem:[#allocation8 + $0x10] sm:$0xf]
    %v327 = vld [vmem:[#allocation8 + $0x14] sm:$0xf]
    %v328 = vld [vmem:[#allocation8 + $0x18] sm:$0xf]
    %v329 = vld [vmem:[#allocation8 + $0x1c] sm:$0xf]
    %v330 = vld [vmem:[#allocation8 + $0x20] sm:$0xf]
    %v331 = vld [vmem:[#allocation8 + $0x24] sm:$0xf]
    %v332 = vld [vmem:[#allocation8 + $0x28] sm:$0xf]
    %v333 = vld [vmem:[#allocation8 + $0x2c] sm:$0xf]
    %v334 = vld [vmem:[#allocation8 + $0x30] sm:$0xf]
    %v335 = vld [vmem:[#allocation8 + $0x34] sm:$0xf]
    %v336 = vld [vmem:[#allocation8 + $0x38] sm:$0xf]
    %v337 = vld [vmem:[#allocation8 + $0x3c] sm:$0xf]
    %v338 = vld [vmem:[%s6] sm:$0x1]
    %v340 = vlaneseq
    %v341 = vshrl.u32 %v340, 7
    %v342 = vsub.s32 0, %v341
    %v343 = vrot.slane %v338, %v342
    %v361 = vunpack.c.l.b16 %v322
    %v362 = vunpack.c.l.b16 %v323
    %v363 = vunpack.c.l.b16 %v324
    %v364 = vunpack.c.l.b16 %v325
    %v365 = vunpack.c.l.b16 %v326
    %v366 = vunpack.c.l.b16 %v327
    %v367 = vunpack.c.l.b16 %v328
    %v368 = vunpack.c.l.b16 %v329
    %v369 = vunpack.c.l.b16 %v330
    %v370 = vunpack.c.l.b16 %v331
    %v371 = vunpack.c.l.b16 %v332
    %v372 = vunpack.c.l.b16 %v333
    %v373 = vunpack.c.l.b16 %v334
    %v374 = vunpack.c.l.b16 %v335
    %v375 = vunpack.c.l.b16 %v336
    %v376 = vunpack.c.l.b16 %v337
    %v377 = vpack.c.b16 %v362, %v361
    %v378 = vpack.c.b16 %v364, %v363
    %v379 = vpack.c.b16 %v366, %v365
    %v380 = vpack.c.b16 %v368, %v367
    %v381 = vpack.c.b16 %v370, %v369
    %v382 = vpack.c.b16 %v372, %v371
    %v383 = vpack.c.b16 %v374, %v373
    %v384 = vpack.c.b16 %v376, %v375
    %393 = vmatprep.subr.bf16.mxu0 0
    %394 = vmatpush1.bf16.msra.mxu0 %v377
    %395 = vmatprep.subr.bf16.mxu0 0
    %396 = vmatpush1.bf16.msra.mxu0 %v378
    %397 = vmatprep.subr.bf16.mxu0 0
    %398 = vmatpush1.bf16.msra.mxu0 %v379
    %399 = vmatprep.subr.bf16.mxu0 0
    %400 = vmatpush1.bf16.msra.mxu0 %v380
    %401 = vmatprep.subr.bf16.mxu0 0
    %402 = vmatpush1.bf16.msra.mxu0 %v381
    %403 = vmatprep.subr.bf16.mxu0 0
    %404 = vmatpush1.bf16.msra.mxu0 %v382
    %405 = vmatprep.subr.bf16.mxu0 0
    %406 = vmatpush1.bf16.msra.mxu0 %v383
    %407 = vmatprep.subr.bf16.mxu0 0
    %408 = vmatpush1.bf16.msra.mxu0 %v384
    %409 = vmatprep.subr.bf16.mxu0 0
    %410 = vmatpush1.bf16.msra.mxu0 0
    %411 = vmatprep.subr.bf16.mxu0 0
    %412 = vmatpush1.bf16.msra.mxu0 0
    %413 = vmatprep.subr.bf16.mxu0 0
    %414 = vmatpush1.bf16.msra.mxu0 0
    %415 = vmatprep.subr.bf16.mxu0 0
    %416 = vmatpush1.bf16.msra.mxu0 0
    %417 = vmatprep.subr.bf16.mxu0 0
    %418 = vmatpush1.bf16.msra.mxu0 0
    %419 = vmatprep.subr.bf16.mxu0 0
    %420 = vmatpush1.bf16.msra.mxu0 0
    %421 = vmatprep.subr.bf16.mxu0 0
    %422 = vmatpush1.bf16.msra.mxu0 0
    %423 = vmatprep.subr.bf16.mxu0 0
    %424 = vmatpush1.bf16.msra.mxu0 0
    %425 = vmatprep.mubr.bf16.mxu0 0
    %426 = vmatmul.mubr.bf16.gmra.mrb[0].mxu0 %v321
    %v427 = vpop.f32.mrb[0].mxu0
    %v428 = vadd.f32 %v343, %v427
    %v429 = vpop.f32.mrb[0].mxu0
    %v430 = vpop.f32.mrb[0].mxu0
    %v431 = vpop.f32.mrb[0].mxu0
    %432 = vdwg.mxu0
    %433 = vst [vmem:[#allocation10] sm:$0xff] %v428
    // Predicated region
    $region46: #{tpu_custom_call.1} parent=1 // pred_check
      _
    $region47: #{tpu_custom_call.1} parent=1 // pred_check_branch
      %435 = sbr.rel (0) target = $region49
    $region48: #{tpu_custom_call.1} parent=1 // pred_region
      %s437 = ssub.s32 128, 128
      %438 = vsyncadd [#allocation4], %s437
      %s440 = sshll.u32 [#allocation10], 4
      %s441 = int_to_ptr.vmem [resolvable:$true] %s440
      %443 = dma.vmem_to_hbm [thread:$0]  %s441, 128, %s7, [#allocation4]
    $region49: #{tpu_custom_call.1} parent=1 // pred_fallthru
      _
    // Predicated region
    $region50: #{tpu_custom_call.1} parent=1 // pred_check
      _
    $region51: #{tpu_custom_call.1} parent=1 // pred_check_branch
      %445 = sbr.rel (0) target = $region53
    $region52: #{tpu_custom_call.1} parent=1 // pred_region
      %446 = dma.done [#allocation4], 128
    $region53: #{tpu_custom_call.1} parent=1 // pred_fallthru
      _
    %447 = vsyncpa [#allocation3], 1
    %448 = vsyncpa [#allocation6], 1
    %449 = vsyncpa [#allocation9], 1
    %450 = vsyncpa [#allocation4], 1

// kernel: tpu_custom_call.1
$region0: #{tpu_custom_call.1}
  #allocation0 [shape = 'u32[]', space=smem, size = 0x4, offset = 0x4, fixed_abs, tag = 'smem constant byte address 0x4 - core index']
  #allocation1 [shape = 'u32[144,128]{1,0:T(1,128)}', space=vmem, size = 0x12000, scoped, tag = 'internal scratch']
  %s0 = inlined_call_operand.hbm [shape: bf16[8,128], index: 0, kind: input, shape index: {}]
  %s1 = inlined_call_operand.hbm [shape: bf16[128,128], index: 1, kind: input, shape index: {}]
  %s2 = inlined_call_operand.hbm [shape: bf16[128,128], index: 2, kind: input, shape index: {}]
  %s3 = inlined_call_operand.hbm [shape: bf16[128,128], index: 3, kind: input, shape index: {}]
  %s4 = inlined_call_operand.vmem [shape: f32[1,128], index: 4, kind: input, shape index: {}]
  %s5 = inlined_call_operand.vmem [shape: f32[1,128], index: 5, kind: input, shape index: {}]
  %s6 = inlined_call_operand.vmem [shape: f32[1,128], index: 6, kind: input, shape index: {}]
  %s7 = inlined_call_operand.hbm [shape: f32[8,128], index: 7, kind: output, shape index: {}]
  %s8 = sld [smem:[#allocation0]]
  $region54: #{tpu_custom_call.1} parent=0
    _
  %s10 = ssub.s32 1, %s8
  %s11 = scalar_select 0, %s10, %s8
  $region1: #{tpu_custom_call.1} parent=0
    #allocation2 [shape = 'u8[2048]{0}', space=vmem, size = 0x800, scoped, tag = 'input window, operand 0, single buffered']
    #allocation3 [shape = 's32[1]{0}', space=sflag, size = 0x4, scoped, tag = 'scoped memory for tpu_custom_call.1']
    #allocation4 [shape = 's32[1]{0}', space=sflag, size = 0x4, scoped, tag = 'scoped memory for tpu_custom_call.1']
    #allocation5 [shape = 'u8[32768]{0}', space=vmem, size = 0x8000, scoped, tag = 'input window, operand 1, single buffered']
    #allocation6 [shape = 's32[1]{0}', space=sflag, size = 0x4, scoped, tag = 'scoped memory for tpu_custom_call.1']
    #allocation7 [shape = 'u8[32768]{0}', space=vmem, size = 0x8000, scoped, tag = 'input window, operand 2, single buffered']
    #allocation8 [shape = 'u8[32768]{0}', space=vmem, size = 0x8000, scoped, tag = 'input window, operand 3, single buffered']
    #allocation9 [shape = 's32[1]{0}', space=sflag, size = 0x4, scoped, tag = 'scoped memory for tpu_custom_call.1']
    #allocation10 [shape = 'u8[4096]{0}', space=vmem, size = 0x1000, scoped, tag = 'output window, operand 0, single buffered']
    %12 = vsyncpa [#allocation3], 0
    %13 = vsyncpa [#allocation6], 0
    %14 = vsyncpa [#allocation9], 0
    %15 = vsyncpa [#allocation4], 0
    // Predicated region
    $region2: #{tpu_custom_call.1} parent=1 // pred_check
      _
    $region3: #{tpu_custom_call.1} parent=1 // pred_check_branch
      %17 = sbr.rel (0) target = $region5
    $region4: #{tpu_custom_call.1} parent=1 // pred_region
      %s19 = ssub.s32 64, 64
      %20 = vsyncadd [#allocation3], %s19
      %s22 = sshll.u32 [#allocation2], 4
      %s23 = int_to_ptr.vmem [resolvable:$true] %s22
      %25 = dma.hbm_to_vmem [thread:$0]  %s0, 64, %s23, [#allocation3]
    $region5: #{tpu_custom_call.1} parent=1 // pred_fallthru
      _
    // Predicated region
    $region6: #{tpu_custom_call.1} parent=1 // pred_check
      _
    $region7: #{tpu_custom_call.1} parent=1 // pred_check_branch
      %27 = sbr.rel (0) target = $region9
    $region8: #{tpu_custom_call.1} parent=1 // pred_region
      %s29 = ssub.s32 1024, 1024
      %30 = vsyncadd [#allocation6], %s29
      %s31 = sshll.u32 [#allocation5], 4
      %s32 = int_to_ptr.vmem [resolvable:$true] %s31
      %37 = dma.hbm_to_vmem [thread:$0]  %s1, 1024, %s32, [#allocation6], 64, 64, 4
    $region9: #{tpu_custom_call.1} parent=1 // pred_fallthru
      _
    // Predicated region
    $region10: #{tpu_custom_call.1} parent=1 // pred_check
      _
    $region11: #{tpu_custom_call.1} parent=1 // pred_check_branch
      %39 = sbr.rel (0) target = $region13
    $region12: #{tpu_custom_call.1} parent=1 // pred_region
      %s41 = ssub.s32 1024, 1024
      %42 = vsyncadd [#allocation6], %s41
      %s43 = sshll.u32 [#allocation7], 4
      %s44 = int_to_ptr.vmem [resolvable:$true] %s43
      %49 = dma.hbm_to_vmem [thread:$0]  %s2, 1024, %s44, [#allocation6], 64, 64, 4
    $region13: #{tpu_custom_call.1} parent=1 // pred_fallthru
      _
    // Predicated region
    $region14: #{tpu_custom_call.1} parent=1 // pred_check
      _
    $region15: #{tpu_custom_call.1} parent=1 // pred_check_branch
      %51 = sbr.rel (0) target = $region17
    $region16: #{tpu_custom_call.1} parent=1 // pred_region
      %s53 = ssub.s32 1024, 1024
      %54 = vsyncadd [#allocation9], %s53
      %s55 = sshll.u32 [#allocation8], 4
      %s56 = int_to_ptr.vmem [resolvable:$true] %s55
      %61 = dma.hbm_to_vmem [thread:$0]  %s3, 1024, %s56, [#allocation9], 64, 64, 4
    $region17: #{tpu_custom_call.1} parent=1 // pred_fallthru
      _
    // Predicated region
    $region18: #{tpu_custom_call.1} parent=1 // pred_check
      _
    $region19: #{tpu_custom_call.1} parent=1 // pred_check_branch
      %63 = sbr.rel (0) target = $region21
    $region20: #{tpu_custom_call.1} parent=1 // pred_region
      _
    $region21: #{tpu_custom_call.1} parent=1 // pred_fallthru
      _
    // Predicated region
    $region22: #{tpu_custom_call.1} parent=1 // pred_check
      _
    $region23: #{tpu_custom_call.1} parent=1 // pred_check_branch
      %65 = sbr.rel (0) target = $region25
    $region24: #{tpu_custom_call.1} parent=1 // pred_region
      _
    $region25: #{tpu_custom_call.1} parent=1 // pred_fallthru
      _
    // Predicated region
    $region26: #{tpu_custom_call.1} parent=1 // pred_check
      _
    $region27: #{tpu_custom_call.1} parent=1 // pred_check_branch
      %67 = sbr.rel (0) target = $region29
    $region28: #{tpu_custom_call.1} parent=1 // pred_region
      _
    $region29: #{tpu_custom_call.1} parent=1 // pred_fallthru
      _
    // Predicated region
    $region30: #{tpu_custom_call.1} parent=1 // pred_check
      _
    $region31: #{tpu_custom_call.1} parent=1 // pred_check_branch
      %69 = sbr.rel (0) target = $region33
    $region32: #{tpu_custom_call.1} parent=1 // pred_region
      %70 = dma.done [#allocation3], 64
    $region33: #{tpu_custom_call.1} parent=1 // pred_fallthru
      _
    // Predicated region
    $region34: #{tpu_custom_call.1} parent=1 // pred_check
      _
    $region35: #{tpu_custom_call.1} parent=1 // pred_check_branch
      %72 = sbr.rel (0) target = $region37
    $region36: #{tpu_custom_call.1} parent=1 // pred_region
      %73 = dma.done [#allocation6], 1024
    $region37: #{tpu_custom_call.1} parent=1 // pred_fallthru
      _
    // Predicated region
    $region38: #{tpu_custom_call.1} parent=1 // pred_check
      _
    $region39: #{tpu_custom_call.1} parent=1 // pred_check_branch
      %75 = sbr.rel (0) target = $region41
    $region40: #{tpu_custom_call.1} parent=1 // pred_region
      %76 = dma.done [#allocation6], 1024
    $region41: #{tpu_custom_call.1} parent=1 // pred_fallthru
      _
    // Predicated region
    $region42: #{tpu_custom_call.1} parent=1 // pred_check
      _
    $region43: #{tpu_custom_call.1} parent=1 // pred_check_branch
      %78 = sbr.rel (0) target = $region45
    $region44: #{tpu_custom_call.1} parent=1 // pred_region
      %79 = dma.done [#allocation9], 1024
    $region45: #{tpu_custom_call.1} parent=1 // pred_fallthru
      _
    %v83 = vld [vmem:[#allocation2] sm:$0xf]
    %v84 = vld [vmem:[#allocation5] sm:$0xf]
    %v85 = vld [vmem:[#allocation5 + $0x4] sm:$0xf]
    %v86 = vld [vmem:[#allocation5 + $0x8] sm:$0xf]
    %v87 = vld [vmem:[#allocation5 + $0xc] sm:$0xf]
    %v88 = vld [vmem:[#allocation5 + $0x10] sm:$0xf]
    %v89 = vld [vmem:[#allocation5 + $0x14] sm:$0xf]
    %v90 = vld [vmem:[#allocation5 + $0x18] sm:$0xf]
    %v91 = vld [vmem:[#allocation5 + $0x1c] sm:$0xf]
    %v92 = vld [vmem:[#allocation5 + $0x20] sm:$0xf]
    %v93 = vld [vmem:[#allocation5 + $0x24] sm:$0xf]
    %v94 = vld [vmem:[#allocation5 + $0x28] sm:$0xf]
    %v95 = vld [vmem:[#allocation5 + $0x2c] sm:$0xf]
    %v96 = vld [vmem:[#allocation5 + $0x30] sm:$0xf]
    %v97 = vld [vmem:[#allocation5 + $0x34] sm:$0xf]
    %v98 = vld [vmem:[#allocation5 + $0x38] sm:$0xf]
    %v99 = vld [vmem:[#allocation5 + $0x3c] sm:$0xf]
    %v100 = vld [vmem:[%s4] sm:$0x1]
    %v102 = vlaneseq
    %v103 = vshrl.u32 %v102, 7
    %v104 = vsub.s32 0, %v103
    %v105 = vrot.slane %v100, %v104
    %v123 = vunpack.c.l.b16 %v84
    %v124 = vunpack.c.l.b16 %v85
    %v125 = vunpack.c.l.b16 %v86
    %v126 = vunpack.c.l.b16 %v87
    %v127 = vunpack.c.l.b16 %v88
    %v128 = vunpack.c.l.b16 %v89
    %v129 = vunpack.c.l.b16 %v90
    %v130 = vunpack.c.l.b16 %v91
    %v131 = vunpack.c.l.b16 %v92
    %v132 = vunpack.c.l.b16 %v93
    %v133 = vunpack.c.l.b16 %v94
    %v134 = vunpack.c.l.b16 %v95
    %v135 = vunpack.c.l.b16 %v96
    %v136 = vunpack.c.l.b16 %v97
    %v137 = vunpack.c.l.b16 %v98
    %v138 = vunpack.c.l.b16 %v99
    %v139 = vpack.c.b16 %v124, %v123
    %v140 = vpack.c.b16 %v126, %v125
    %v141 = vpack.c.b16 %v128, %v127
    %v142 = vpack.c.b16 %v130, %v129
    %v143 = vpack.c.b16 %v132, %v131
    %v144 = vpack.c.b16 %v134, %v133
    %v145 = vpack.c.b16 %v136, %v135
    %v146 = vpack.c.b16 %v138, %v137
    %155 = vmatprep.subr.bf16.mxu0 0
    %156 = vmatpush1.bf16.msra.mxu0 %v139
    %157 = vmatprep.subr.bf16.mxu0 0
    %158 = vmatpush1.bf16.msra.mxu0 %v140
    %159 = vmatprep.subr.bf16.mxu0 0
    %160 = vmatpush1.bf16.msra.mxu0 %v141
    %161 = vmatprep.subr.bf16.mxu0 0
    %162 = vmatpush1.bf16.msra.mxu0 %v142
    %163 = vmatprep.subr.bf16.mxu0 0
    %164 = vmatpush1.bf16.msra.mxu0 %v143
    %165 = vmatprep.subr.bf16.mxu0 0
    %166 = vmatpush1.bf16.msra.mxu0 %v144
    %167 = vmatprep.subr.bf16.mxu0 0
    %168 = vmatpush1.bf16.msra.mxu0 %v145
    %169 = vmatprep.subr.bf16.mxu0 0
    %170 = vmatpush1.bf16.msra.mxu0 %v146
    %171 = vmatprep.subr.bf16.mxu0 0
    %172 = vmatpush1.bf16.msra.mxu0 0
    %173 = vmatprep.subr.bf16.mxu0 0
    %174 = vmatpush1.bf16.msra.mxu0 0
    %175 = vmatprep.subr.bf16.mxu0 0
    %176 = vmatpush1.bf16.msra.mxu0 0
    %177 = vmatprep.subr.bf16.mxu0 0
    %178 = vmatpush1.bf16.msra.mxu0 0
    %179 = vmatprep.subr.bf16.mxu0 0
    %180 = vmatpush1.bf16.msra.mxu0 0
    %181 = vmatprep.subr.bf16.mxu0 0
    %182 = vmatpush1.bf16.msra.mxu0 0
    %183 = vmatprep.subr.bf16.mxu0 0
    %184 = vmatpush1.bf16.msra.mxu0 0
    %185 = vmatprep.subr.bf16.mxu0 0
    %186 = vmatpush1.bf16.msra.mxu0 0
    %187 = vmatprep.mubr.bf16.mxu0 0
    %188 = vmatmul.mubr.bf16.gmra.mrb[0].mxu0 %v83
    %v189 = vpop.f32.mrb[0].mxu0
    %v190 = vadd.f32 %v105, %v189
    %v191 = vpop.f32.mrb[0].mxu0
    %v192 = vpop.f32.mrb[0].mxu0
    %v193 = vpop.f32.mrb[0].mxu0
    %194 = vdwg.mxu0
    %v195 = vpack.c.bf16 %v190, %v190
    %vm196 = vcmp.gt.bf16.partialorder %v195, 0
    %v198 = vmul.bf16 %v195, 1069105081
    %v199 = vpow.bf16.pop %v198
    %v200 = vsub.bf16 %v199, 1065369472
    %v201 = vmul.bf16 %v200, 1071005654
    %v202 = vsel %vm196, %v195, %v201
    %v203 = vld [vmem:[#allocation7] sm:$0xf]
    %v204 = vld [vmem:[#allocation7 + $0x4] sm:$0xf]
    %v205 = vld [vmem:[#allocation7 + $0x8] sm:$0xf]
    %v206 = vld [vmem:[#allocation7 + $0xc] sm:$0xf]
    %v207 = vld [vmem:[#allocation7 + $0x10] sm:$0xf]
    %v208 = vld [vmem:[#allocation7 + $0x14] sm:$0xf]
    %v209 = vld [vmem:[#allocation7 + $0x18] sm:$0xf]
    %v210 = vld [vmem:[#allocation7 + $0x1c] sm:$0xf]
    %v211 = vld [vmem:[#allocation7 + $0x20] sm:$0xf]
    %v212 = vld [vmem:[#allocation7 + $0x24] sm:$0xf]
    %v213 = vld [vmem:[#allocation7 + $0x28] sm:$0xf]
    %v214 = vld [vmem:[#allocation7 + $0x2c] sm:$0xf]
    %v215 = vld [vmem:[#allocation7 + $0x30] sm:$0xf]
    %v216 = vld [vmem:[#allocation7 + $0x34] sm:$0xf]
    %v217 = vld [vmem:[#allocation7 + $0x38] sm:$0xf]
    %v218 = vld [vmem:[#allocation7 + $0x3c] sm:$0xf]
    %v219 = vld [vmem:[%s5] sm:$0x1]
    %v221 = vlaneseq
    %v222 = vshrl.u32 %v221, 7
    %v223 = vsub.s32 0, %v222
    %v224 = vrot.slane %v219, %v223
    %v242 = vunpack.c.l.b16 %v203
    %v243 = vunpack.c.l.b16 %v204
    %v244 = vunpack.c.l.b16 %v205
    %v245 = vunpack.c.l.b16 %v206
    %v246 = vunpack.c.l.b16 %v207
    %v247 = vunpack.c.l.b16 %v208
    %v248 = vunpack.c.l.b16 %v209
    %v249 = vunpack.c.l.b16 %v210
    %v250 = vunpack.c.l.b16 %v211
    %v251 = vunpack.c.l.b16 %v212
    %v252 = vunpack.c.l.b16 %v213
    %v253 = vunpack.c.l.b16 %v214
    %v254 = vunpack.c.l.b16 %v215
    %v255 = vunpack.c.l.b16 %v216
    %v256 = vunpack.c.l.b16 %v217
    %v257 = vunpack.c.l.b16 %v218
    %v258 = vpack.c.b16 %v243, %v242
    %v259 = vpack.c.b16 %v245, %v244
    %v260 = vpack.c.b16 %v247, %v246
    %v261 = vpack.c.b16 %v249, %v248
    %v262 = vpack.c.b16 %v251, %v250
    %v263 = vpack.c.b16 %v253, %v252
    %v264 = vpack.c.b16 %v255, %v254
    %v265 = vpack.c.b16 %v257, %v256
    %274 = vmatprep.subr.bf16.mxu0 0
    %275 = vmatpush1.bf16.msra.mxu0 %v258
    %276 = vmatprep.subr.bf16.mxu0 0
    %277 = vmatpush1.bf16.msra.mxu0 %v259
    %278 = vmatprep.subr.bf16.mxu0 0
    %279 = vmatpush1.bf16.msra.mxu0 %v260
    %280 = vmatprep.subr.bf16.mxu0 0
    %281 = vmatpush1.bf16.msra.mxu0 %v261
    %282 = vmatprep.subr.bf16.mxu0 0
    %283 = vmatpush1.bf16.msra.mxu0 %v262
    %284 = vmatprep.subr.bf16.mxu0 0
    %285 = vmatpush1.bf16.msra.mxu0 %v263
    %286 = vmatprep.subr.bf16.mxu0 0
    %287 = vmatpush1.bf16.msra.mxu0 %v264
    %288 = vmatprep.subr.bf16.mxu0 0
    %289 = vmatpush1.bf16.msra.mxu0 %v265
    %290 = vmatprep.subr.bf16.mxu0 0
    %291 = vmatpush1.bf16.msra.mxu0 0
    %292 = vmatprep.subr.bf16.mxu0 0
    %293 = vmatpush1.bf16.msra.mxu0 0
    %294 = vmatprep.subr.bf16.mxu0 0
    %295 = vmatpush1.bf16.msra.mxu0 0
    %296 = vmatprep.subr.bf16.mxu0 0
    %297 = vmatpush1.bf16.msra.mxu0 0
    %298 = vmatprep.subr.bf16.mxu0 0
    %299 = vmatpush1.bf16.msra.mxu0 0
    %300 = vmatprep.subr.bf16.mxu0 0
    %301 = vmatpush1.bf16.msra.mxu0 0
    %302 = vmatprep.subr.bf16.mxu0 0
    %303 = vmatpush1.bf16.msra.mxu0 0
    %304 = vmatprep.subr.bf16.mxu0 0
    %305 = vmatpush1.bf16.msra.mxu0 0
    %306 = vmatprep.mubr.bf16.mxu0 0
    %307 = vmatmul.mubr.bf16.gmra.mrb[0].mxu0 %v202
    %v308 = vpop.f32.mrb[0].mxu0
    %v309 = vadd.f32 %v224, %v308
    %v310 = vpop.f32.mrb[0].mxu0
    %v311 = vpop.f32.mrb[0].mxu0
    %v312 = vpop.f32.mrb[0].mxu0
    %313 = vdwg.mxu0
    %v314 = vpack.c.bf16 %v309, %v309
    %vm315 = vcmp.gt.bf16.partialorder %v314, 0
    %v317 = vmul.bf16 %v314, 1069105081
    %v318 = vpow.bf16.pop %v317
    %v319 = vsub.bf16 %v318, 1065369472
    %v320 = vmul.bf16 %v319, 1071005654
    %v321 = vsel %vm315, %v314, %v320
    %v322 = vld [vmem:[#allocation8] sm:$0xf]
    %v323 = vld [vmem:[#allocation8 + $0x4] sm:$0xf]
    %v324 = vld [vmem:[#allocation8 + $0x8] sm:$0xf]
    %v325 = vld [vmem:[#allocation8 + $0xc] sm:$0xf]
    %v326 = vld [vmem:[#allocation8 + $0x10] sm:$0xf]
    %v327 = vld [vmem:[#allocation8 + $0x14] sm:$0xf]
    %v328 = vld [vmem:[#allocation8 + $0x18] sm:$0xf]
    %v329 = vld [vmem:[#allocation8 + $0x1c] sm:$0xf]
    %v330 = vld [vmem:[#allocation8 + $0x20] sm:$0xf]
    %v331 = vld [vmem:[#allocation8 + $0x24] sm:$0xf]
    %v332 = vld [vmem:[#allocation8 + $0x28] sm:$0xf]
    %v333 = vld [vmem:[#allocation8 + $0x2c] sm:$0xf]
    %v334 = vld [vmem:[#allocation8 + $0x30] sm:$0xf]
    %v335 = vld [vmem:[#allocation8 + $0x34] sm:$0xf]
    %v336 = vld [vmem:[#allocation8 + $0x38] sm:$0xf]
    %v337 = vld [vmem:[#allocation8 + $0x3c] sm:$0xf]
    %v338 = vld [vmem:[%s6] sm:$0x1]
    %v340 = vlaneseq
    %v341 = vshrl.u32 %v340, 7
    %v342 = vsub.s32 0, %v341
    %v343 = vrot.slane %v338, %v342
    %v361 = vunpack.c.l.b16 %v322
    %v362 = vunpack.c.l.b16 %v323
    %v363 = vunpack.c.l.b16 %v324
    %v364 = vunpack.c.l.b16 %v325
    %v365 = vunpack.c.l.b16 %v326
    %v366 = vunpack.c.l.b16 %v327
    %v367 = vunpack.c.l.b16 %v328
    %v368 = vunpack.c.l.b16 %v329
    %v369 = vunpack.c.l.b16 %v330
    %v370 = vunpack.c.l.b16 %v331
    %v371 = vunpack.c.l.b16 %v332
    %v372 = vunpack.c.l.b16 %v333
    %v373 = vunpack.c.l.b16 %v334
    %v374 = vunpack.c.l.b16 %v335
    %v375 = vunpack.c.l.b16 %v336
    %v376 = vunpack.c.l.b16 %v337
    %v377 = vpack.c.b16 %v362, %v361
    %v378 = vpack.c.b16 %v364, %v363
    %v379 = vpack.c.b16 %v366, %v365
    %v380 = vpack.c.b16 %v368, %v367
    %v381 = vpack.c.b16 %v370, %v369
    %v382 = vpack.c.b16 %v372, %v371
    %v383 = vpack.c.b16 %v374, %v373
    %v384 = vpack.c.b16 %v376, %v375
    %393 = vmatprep.subr.bf16.mxu0 0
    %394 = vmatpush1.bf16.msra.mxu0 %v377
    %395 = vmatprep.subr.bf16.mxu0 0
    %396 = vmatpush1.bf16.msra.mxu0 %v378
    %397 = vmatprep.subr.bf16.mxu0 0
    %398 = vmatpush1.bf16.msra.mxu0 %v379
    %399 = vmatprep.subr.bf16.mxu0 0
    %400 = vmatpush1.bf16.msra.mxu0 %v380
    %401 = vmatprep.subr.bf16.mxu0 0
    %402 = vmatpush1.bf16.msra.mxu0 %v381
    %403 = vmatprep.subr.bf16.mxu0 0
    %404 = vmatpush1.bf16.msra.mxu0 %v382
    %405 = vmatprep.subr.bf16.mxu0 0
    %406 = vmatpush1.bf16.msra.mxu0 %v383
    %407 = vmatprep.subr.bf16.mxu0 0
    %408 = vmatpush1.bf16.msra.mxu0 %v384
    %409 = vmatprep.subr.bf16.mxu0 0
    %410 = vmatpush1.bf16.msra.mxu0 0
    %411 = vmatprep.subr.bf16.mxu0 0
    %412 = vmatpush1.bf16.msra.mxu0 0
    %413 = vmatprep.subr.bf16.mxu0 0
    %414 = vmatpush1.bf16.msra.mxu0 0
    %415 = vmatprep.subr.bf16.mxu0 0
    %416 = vmatpush1.bf16.msra.mxu0 0
    %417 = vmatprep.subr.bf16.mxu0 0
    %418 = vmatpush1.bf16.msra.mxu0 0
    %419 = vmatprep.subr.bf16.mxu0 0
    %420 = vmatpush1.bf16.msra.mxu0 0
    %421 = vmatprep.subr.bf16.mxu0 0
    %422 = vmatpush1.bf16.msra.mxu0 0
    %423 = vmatprep.subr.bf16.mxu0 0
    %424 = vmatpush1.bf16.msra.mxu0 0
    %425 = vmatprep.mubr.bf16.mxu0 0
    %426 = vmatmul.mubr.bf16.gmra.mrb[0].mxu0 %v321
    %v427 = vpop.f32.mrb[0].mxu0
    %v428 = vadd.f32 %v343, %v427
    %v429 = vpop.f32.mrb[0].mxu0
    %v430 = vpop.f32.mrb[0].mxu0
    %v431 = vpop.f32.mrb[0].mxu0
    %432 = vdwg.mxu0
    %433 = vst [vmem:[#allocation10] sm:$0xff] %v428
    // Predicated region
    $region46: #{tpu_custom_call.1} parent=1 // pred_check
      _
    $region47: #{tpu_custom_call.1} parent=1 // pred_check_branch
      %435 = sbr.rel (0) target = $region49
    $region48: #{tpu_custom_call.1} parent=1 // pred_region
      %s437 = ssub.s32 128, 128
      %438 = vsyncadd [#allocation4], %s437
      %s440 = sshll.u32 [#allocation10], 4
      %s441 = int_to_ptr.vmem [resolvable:$true] %s440
      %443 = dma.vmem_to_hbm [thread:$0]  %s441, 128, %s7, [#allocation4]
    $region49: #{tpu_custom_call.1} parent=1 // pred_fallthru
      _
    // Predicated region
    $region50: #{tpu_custom_call.1} parent=1 // pred_check
      _
    $region51: #{tpu_custom_call.1} parent=1 // pred_check_branch
      %445 = sbr.rel (0) target = $region53
    $region52: #{tpu_custom_call.1} parent=1 // pred_region
      %446 = dma.done [#allocation4], 128
    $region53: #{tpu_custom_call.1} parent=1 // pred_fallthru
      _
    %447 = vsyncpa [#allocation3], 1
    %448 = vsyncpa [#allocation6], 1
    %449 = vsyncpa [#allocation9], 1
    %450 = vsyncpa [#allocation4], 1

</llo_original>
